<compile_context>
chip_gen: v7x
topology: tpu7x:2x2x1
jax: 0.10.0
libtpu: 0.0.40
codegen_flags: <defaults>
</compile_context>

<pallas_src>
import jax
import jax.numpy as jnp
from jax import lax
from jax.experimental import pallas as pl
from jax.experimental.pallas import tpu as pltpu


def _round_up(v, m):
    return ((v + m - 1) // m) * m


def ds_node_kernel(x_ref, bidx_ref, w1x_ref, gu_ref, w2_ref, b2_ref, o_ref):
    cdt = w1x_ref.dtype  # compute (MXU operand) dtype: bf16 or f32
    g_pad = gu_ref.shape[0]

    # One-hot over (padded) graph ids: (tile_n, 1) == (1, G_pad) -> (tile_n, G_pad).
    # Garbage ids from the masked last tile simply produce all-zero rows.
    onehot = (bidx_ref[...] ==
              lax.broadcasted_iota(jnp.int32, (1, g_pad), 1)).astype(cdt)

    # First layer of phi_x on concat([x, u[batch]]), with W1 split exactly:
    #   h = x @ W1_x + (u @ W1_u + b1)[batch]
    xt = x_ref[...].astype(cdt)
    h = jnp.dot(xt, w1x_ref[...], preferred_element_type=jnp.float32)
    h = h + jnp.dot(onehot, gu_ref[...], preferred_element_type=jnp.float32)
    h = jnp.maximum(h, 0.0)  # ReLU in f32 (v5e has no bf16 VPU)

    out = jnp.dot(h.astype(cdt), w2_ref[...], preferred_element_type=jnp.float32)
    out = out + b2_ref[...]  # bias add in f32
    o_ref[...] = out.astype(o_ref.dtype)


def ds_node_model(x, u, batch, params, *, tile_n=512,
                  compute_dtype=jnp.bfloat16, out_dtype=None,
                  core_parallel=False):
    """Pallas implementation of DS_NodeModel.forward.

    x:     [N, f_x]   node features (pass bf16 to halve the HBM read on v6e/v7x)
    u:     [G, f_u]   per-graph (global) features
    batch: [N] int    graph id of each node
    """
    N, f_x = x.shape
    G, f_u = u.shape
    w1x, w1u, b1, w2, b2 = params
    H = w1x.shape[1]
    f_out = w2.shape[1]
    out_dtype = x.dtype if out_dtype is None else out_dtype

    # ---- wrapper-side prep (all tiny; no [N, *] HBM round-trips) -------------
    # Per-graph table with bias folded in: gu[g] = u[g] @ W1_u + b1   -> [G, H].
    # (f32 precompute, then cast once to the MXU operand dtype.)
    gu = (jnp.dot(u.astype(jnp.float32), w1u.astype(jnp.float32),
                  preferred_element_type=jnp.float32)
          + b1.astype(jnp.float32))
    g_pad = max(8, _round_up(G, 8))
    gu = jnp.pad(gu, ((0, g_pad - G), (0, 0))).astype(compute_dtype)  # zero rows: never selected

    w1x_c = w1x.astype(compute_dtype)
    w2_c = w2.astype(compute_dtype)
    b2_f32 = b2.astype(jnp.float32)           # bias add stays f32

    # Node ids as a lane-1 column; reshape is free (no HBM copy of x anywhere).
    bidx = batch.astype(jnp.int32).reshape(N, 1)

    # Clamp tile to the problem size (multiple of 16 so bf16 sublane packing is
    # clean); grid handles non-divisible N via partial-block masking.
    tile_eff = _round_up(min(tile_n, _round_up(N, 16)), 16)
    n_tiles = pl.cdiv(N, tile_eff)

    # v7x: set core_parallel=True (and ensure n_tiles >= 2, ideally >= 4) so the
    # row-tile axis is actually sharded across the two TensorCores.
    dim_sem = pltpu.CORE_PARALLEL if core_parallel else "parallel"

    out = pl.pallas_call(
        ds_node_kernel,
        out_shape=jax.ShapeDtypeStruct((N, f_out), out_dtype),
        grid_spec=pltpu.PrefetchScalarGridSpec(
            num_scalar_prefetch=0,
            grid=(n_tiles,),
            in_specs=[
                pl.BlockSpec((tile_eff, f_x), lambda i: (i, 0)),   # x tile
                pl.BlockSpec((tile_eff, 1), lambda i: (i, 0)),     # batch ids tile
                pl.BlockSpec((f_x, H), lambda i: (0, 0)),          # W1_x (resident)
                pl.BlockSpec((g_pad, H), lambda i: (0, 0)),        # gu = u@W1_u + b1
                pl.BlockSpec((H, f_out), lambda i: (0, 0)),        # W2 (resident)
                pl.BlockSpec((1, f_out), lambda i: (0, 0)),        # b2 (f32)
            ],
            out_specs=pl.BlockSpec((tile_eff, f_out), lambda i: (i, 0)),
        ),
        compiler_params=pltpu.CompilerParams(
            dimension_semantics=(dim_sem,),
        ),
    )(x, bidx, w1x_c, gu, w2_c, b2_f32)

    return out


def init_params(key, f_x, f_u, hidden, f_out, dtype=jnp.float32):
    k1, k2, k3, k4 = jax.random.split(key, 4)
    f_in = f_x + f_u
    s1 = 1.0 / jnp.sqrt(f_in)
    s2 = 1.0 / jnp.sqrt(hidden)
    w1 = jax.random.uniform(k1, (f_in, hidden), dtype, -s1, s1)
    b1 = jax.random.uniform(k2, (1, hidden), dtype, -s1, s1)
    w2 = jax.random.uniform(k3, (hidden, f_out), dtype, -s2, s2)
    b2 = jax.random.uniform(k4, (1, f_out), dtype, -s2, s2)
    # split W1 into the part acting on x and the part acting on u[batch]
    w1x, w1u = w1[:f_x], w1[f_x:]
    return (w1x, w1u, b1, w2, b2)


def reference(x, u, batch, params):
    w1x, w1u, b1, w2, b2 = params
    cat = jnp.concatenate([x, u[batch]], axis=1)
    w1 = jnp.concatenate([w1x, w1u], axis=0)
    h = jnp.maximum(cat @ w1 + b1, 0.0)
    return h @ w2 + b2


if __name__ == "__main__":
    # Small, module-consistent shapes: 300 nodes across 3 graphs
    # (N deliberately NOT a multiple of the tile size to exercise the
    # ragged-last-tile / masked-write path).
    N, G = 300, 3
    f_x, f_u, hidden, f_out = 32, 16, 128, 32

    key = jax.random.PRNGKey(0)
    kx, ku, kb, kp = jax.random.split(key, 4)
    x = jax.random.normal(kx, (N, f_x), jnp.float32)
    u = jax.random.normal(ku, (G, f_u), jnp.float32)
    batch = jax.random.randint(kb, (N,), 0, G, dtype=jnp.int32)

    params = init_params(kp, f_x, f_u, hidden, f_out)
    ref = reference(x, u, batch, params)

    # 1) Exact f32 path — bit-for-bit same math as the module (tight tolerance).
    out_f32 = ds_node_model(x, u, batch, params, compute_dtype=jnp.float32)
    out_f32 = jax.block_until_ready(out_f32)
    assert out_f32.shape == (N, f_out)
    assert jnp.allclose(out_f32, ref, atol=1e-4, rtol=1e-4)

    # 2) bf16 MXU-operand path (recommended on v6e/v7x): activations arrive in
    #    bf16, weights cast once; accumulation / ReLU / bias stay f32.
    out_bf16 = ds_node_model(x.astype(jnp.bfloat16), u, batch, params,
                             compute_dtype=jnp.bfloat16)
    out_bf16 = jax.block_until_ready(out_bf16)
    assert out_bf16.shape == (N, f_out)
    assert jnp.allclose(out_bf16.astype(jnp.float32), ref, atol=5e-2, rtol=5e-2)

    print("KERNEL_OK")
</pallas_src>

<mosaic_0001>
module attributes {stable_mosaic.version = 11 : i64} {
  func.func @ds_node_kernel(%arg0: i32, %arg1: memref<304x32xf32, #tpu.memory_space<vmem>>, %arg2: memref<304x1xi32, #tpu.memory_space<vmem>>, %arg3: memref<32x128xf32, #tpu.memory_space<vmem>>, %arg4: memref<8x128xf32, #tpu.memory_space<vmem>>, %arg5: memref<128x32xf32, #tpu.memory_space<vmem>>, %arg6: memref<1x32xf32, #tpu.memory_space<vmem>>, %arg7: memref<304x32xf32, #tpu.memory_space<vmem>>) attributes {dimension_semantics = [#tpu.dimension_semantics<parallel>], iteration_bounds = array<i64: 1>, scalar_prefetch = 0 : i64, scratch_operands = 0 : i64, tpu.core_type = #tpu.core_type<tc>, window_params = [{transform_indices = @transform_0, window_bounds = array<i64: 304, 32>}, {transform_indices = @transform_1, window_bounds = array<i64: 304, 1>}, {pipeline_mode = #tpu.pipeline_mode<synchronous>, transform_indices = @transform_2, window_bounds = array<i64: 32, 128>}, {pipeline_mode = #tpu.pipeline_mode<synchronous>, transform_indices = @transform_3, window_bounds = array<i64: 8, 128>}, {pipeline_mode = #tpu.pipeline_mode<synchronous>, transform_indices = @transform_4, window_bounds = array<i64: 128, 32>}, {pipeline_mode = #tpu.pipeline_mode<synchronous>, transform_indices = @transform_5, window_bounds = array<i64: 1, 32>}, {transform_indices = @transform_6, window_bounds = array<i64: 304, 32>}]} {
    %c0 = arith.constant 0 : index
    %c0_0 = arith.constant 0 : index
    %0 = vector.load %arg2[%c0, %c0_0] : memref<304x1xi32, #tpu.memory_space<vmem>>, vector<304x1xi32>
    %1 = tpu.iota {dimensions = array<i32: 1>} : vector<1x8xi32>
    %2 = vector.broadcast %0 : vector<304x1xi32> to vector<304x8xi32>
    %3 = vector.broadcast %1 : vector<1x8xi32> to vector<304x8xi32>
    %4 = arith.cmpi eq, %2, %3 : vector<304x8xi32>
    %5 = arith.extui %4 : vector<304x8xi1> to vector<304x8xi32>
    %6 = arith.sitofp %5 : vector<304x8xi32> to vector<304x8xf32>
    %c0_1 = arith.constant 0 : index
    %c0_2 = arith.constant 0 : index
    %7 = vector.load %arg1[%c0_1, %c0_2] : memref<304x32xf32, #tpu.memory_space<vmem>>, vector<304x32xf32>
    %c0_3 = arith.constant 0 : index
    %c0_4 = arith.constant 0 : index
    %8 = vector.load %arg3[%c0_3, %c0_4] : memref<32x128xf32, #tpu.memory_space<vmem>>, vector<32x128xf32>
    %cst = arith.constant dense<0.000000e+00> : vector<304x128xf32>
    %9 = tpu.matmul %7, %8, %cst {dimension_numbers = #tpu.dot_dimension_numbers<[1], [0], [0], [1], [0, 0, 1, 1], [], []>} : vector<304x32xf32>, vector<32x128xf32>, vector<304x128xf32> -> vector<304x128xf32>
    %c0_5 = arith.constant 0 : index
    %c0_6 = arith.constant 0 : index
    %10 = vector.load %arg4[%c0_5, %c0_6] : memref<8x128xf32, #tpu.memory_space<vmem>>, vector<8x128xf32>
    %cst_7 = arith.constant dense<0.000000e+00> : vector<304x128xf32>
    %11 = tpu.matmul %6, %10, %cst_7 {dimension_numbers = #tpu.dot_dimension_numbers<[1], [0], [0], [1], [0, 0, 1, 1], [], []>} : vector<304x8xf32>, vector<8x128xf32>, vector<304x128xf32> -> vector<304x128xf32>
    %12 = arith.addf %9, %11 : vector<304x128xf32>
    %cst_8 = arith.constant 0.000000e+00 : f32
    %13 = vector.broadcast %cst_8 : f32 to vector<304x128xf32>
    %14 = arith.maximumf %12, %13 : vector<304x128xf32>
    %c0_9 = arith.constant 0 : index
    %c0_10 = arith.constant 0 : index
    %15 = vector.load %arg5[%c0_9, %c0_10] : memref<128x32xf32, #tpu.memory_space<vmem>>, vector<128x32xf32>
    %cst_11 = arith.constant dense<0.000000e+00> : vector<304x32xf32>
    %16 = tpu.matmul %14, %15, %cst_11 {dimension_numbers = #tpu.dot_dimension_numbers<[1], [0], [0], [1], [0, 0, 1, 1], [], []>} : vector<304x128xf32>, vector<128x32xf32>, vector<304x32xf32> -> vector<304x32xf32>
    %c0_12 = arith.constant 0 : index
    %c0_13 = arith.constant 0 : index
    %17 = vector.load %arg6[%c0_12, %c0_13] : memref<1x32xf32, #tpu.memory_space<vmem>>, vector<1x32xf32>
    %18 = vector.broadcast %17 : vector<1x32xf32> to vector<304x32xf32>
    %19 = arith.addf %16, %18 : vector<304x32xf32>
    %c0_14 = arith.constant 0 : index
    %c0_15 = arith.constant 0 : index
    %20 = vector.load %arg7[%c0_14, %c0_15] : memref<304x32xf32, #tpu.memory_space<vmem>>, vector<304x32xf32>
    tpu.vector_store %arg7[%c0_14, %c0_15], %19 {strides = array<i32>} : memref<304x32xf32, #tpu.memory_space<vmem>>, vector<304x32xf32>,
    return
  }
  func.func @transform_0(%arg0: i32) -> (i32, i32) {
    %c0_i32 = arith.constant 0 : i32
    %c0_i32_0 = arith.constant 0 : i32
    return %arg0, %c0_i32 : i32, i32
  }
  func.func @transform_1(%arg0: i32) -> (i32, i32) {
    %c0_i32 = arith.constant 0 : i32
    %c0_i32_0 = arith.constant 0 : i32
    return %arg0, %c0_i32 : i32, i32
  }
  func.func @transform_2(%arg0: i32) -> (i32, i32) {
    %c0_i32 = arith.constant 0 : i32
    %c0_i32_0 = arith.constant 0 : i32
    %c0_i32_1 = arith.constant 0 : i32
    return %c0_i32, %c0_i32_0 : i32, i32
  }
  func.func @transform_3(%arg0: i32) -> (i32, i32) {
    %c0_i32 = arith.constant 0 : i32
    %c0_i32_0 = arith.constant 0 : i32
    %c0_i32_1 = arith.constant 0 : i32
    return %c0_i32, %c0_i32_0 : i32, i32
  }
  func.func @transform_4(%arg0: i32) -> (i32, i32) {
    %c0_i32 = arith.constant 0 : i32
    %c0_i32_0 = arith.constant 0 : i32
    %c0_i32_1 = arith.constant 0 : i32
    return %c0_i32, %c0_i32_0 : i32, i32
  }
  func.func @transform_5(%arg0: i32) -> (i32, i32) {
    %c0_i32 = arith.constant 0 : i32
    %c0_i32_0 = arith.constant 0 : i32
    %c0_i32_1 = arith.constant 0 : i32
    return %c0_i32, %c0_i32_0 : i32, i32
  }
  func.func @transform_6(%arg0: i32) -> (i32, i32) {
    %c0_i32 = arith.constant 0 : i32
    %c0_i32_0 = arith.constant 0 : i32
    return %arg0, %c0_i32 : i32, i32
  }
}

</mosaic_0001>

<llo_original>
// kernel: tpu_custom_call.1
$region0: #{tpu_custom_call.1}
  #allocation0 [shape = 'u32[]', space=smem, size = 0x4, offset = 0x4, fixed_abs, tag = 'smem constant byte address 0x4 - core index']
  #allocation1 [shape = 'u32[144,128]{1,0:T(1,128)}', space=vmem, size = 0x12000, scoped, tag = 'internal scratch']
  %s0 = inlined_call_operand.vmem [shape: f32[300,32], index: 0, kind: input, shape index: {}]
  %s1 = inlined_call_operand.vmem [shape: s32[300,1], index: 1, kind: input, shape index: {}]
  %s2 = inlined_call_operand.vmem [shape: f32[32,128], index: 2, kind: input, shape index: {}]
  %s3 = inlined_call_operand.vmem [shape: f32[8,128], index: 3, kind: input, shape index: {}]
  %s4 = inlined_call_operand.vmem [shape: f32[128,32], index: 4, kind: input, shape index: {}]
  %s5 = inlined_call_operand.vmem [shape: f32[1,32], index: 5, kind: input, shape index: {}]
  %s6 = inlined_call_operand.vmem [shape: f32[300,32], index: 6, kind: output, shape index: {}]
  %s7 = sld [smem:[#allocation0]]
  $region34: #{tpu_custom_call.1} parent=0
    _
  %s9 = ssub.s32 1, %s7
  %s10 = scalar_select 0, %s9, %s7
  // Predicated region
  $region2: #{tpu_custom_call.1} parent=0 // pred_check
    _
  $region3: #{tpu_custom_call.1} parent=0 // pred_check_branch
    %12 = sbr.rel (0) target = $region5
  $region4: #{tpu_custom_call.1} parent=0 // pred_region
    _
  $region5: #{tpu_custom_call.1} parent=0 // pred_fallthru
    _
  // Predicated region
  $region6: #{tpu_custom_call.1} parent=0 // pred_check
    _
  $region7: #{tpu_custom_call.1} parent=0 // pred_check_branch
    %14 = sbr.rel (0) target = $region9
  $region8: #{tpu_custom_call.1} parent=0 // pred_region
    _
  $region9: #{tpu_custom_call.1} parent=0 // pred_fallthru
    _
  // Predicated region
  $region10: #{tpu_custom_call.1} parent=0 // pred_check
    _
  $region11: #{tpu_custom_call.1} parent=0 // pred_check_branch
    %16 = sbr.rel (0) target = $region13
  $region12: #{tpu_custom_call.1} parent=0 // pred_region
    _
  $region13: #{tpu_custom_call.1} parent=0 // pred_fallthru
    _
  // Predicated region
  $region14: #{tpu_custom_call.1} parent=0 // pred_check
    _
  $region15: #{tpu_custom_call.1} parent=0 // pred_check_branch
    %18 = sbr.rel (0) target = $region17
  $region16: #{tpu_custom_call.1} parent=0 // pred_region
    _
  $region17: #{tpu_custom_call.1} parent=0 // pred_fallthru
    _
  // Predicated region
  $region18: #{tpu_custom_call.1} parent=0 // pred_check
    _
  $region19: #{tpu_custom_call.1} parent=0 // pred_check_branch
    %20 = sbr.rel (0) target = $region21
  $region20: #{tpu_custom_call.1} parent=0 // pred_region
    _
  $region21: #{tpu_custom_call.1} parent=0 // pred_fallthru
    _
  // Predicated region
  $region22: #{tpu_custom_call.1} parent=0 // pred_check
    _
  $region23: #{tpu_custom_call.1} parent=0 // pred_check_branch
    %22 = sbr.rel (0) target = $region25
  $region24: #{tpu_custom_call.1} parent=0 // pred_region
    _
  $region25: #{tpu_custom_call.1} parent=0 // pred_fallthru
    _
  %v23 = vld [vmem:[%s1] sm:$0xff]
  %v24 = vld [vmem:[%s1 + $0x8] sm:$0xff]
  %v25 = vld [vmem:[%s1 + $0x10] sm:$0xff]
  %v26 = vld [vmem:[%s1 + $0x18] sm:$0xff]
  %v27 = vld [vmem:[%s1 + $0x20] sm:$0xff]
  %v28 = vld [vmem:[%s1 + $0x28] sm:$0xff]
  %v29 = vld [vmem:[%s1 + $0x30] sm:$0xff]
  %v30 = vld [vmem:[%s1 + $0x38] sm:$0xff]
  %v31 = vld [vmem:[%s1 + $0x40] sm:$0xff]
  %v32 = vld [vmem:[%s1 + $0x48] sm:$0xff]
  %v33 = vld [vmem:[%s1 + $0x50] sm:$0xff]
  %v34 = vld [vmem:[%s1 + $0x58] sm:$0xff]
  %v35 = vld [vmem:[%s1 + $0x60] sm:$0xff]
  %v36 = vld [vmem:[%s1 + $0x68] sm:$0xff]
  %v37 = vld [vmem:[%s1 + $0x70] sm:$0xff]
  %v38 = vld [vmem:[%s1 + $0x78] sm:$0xff]
  %v39 = vld [vmem:[%s1 + $0x80] sm:$0xff]
  %v40 = vld [vmem:[%s1 + $0x88] sm:$0xff]
  %v41 = vld [vmem:[%s1 + $0x90] sm:$0xff]
  %v42 = vld [vmem:[%s1 + $0x98] sm:$0xff]
  %v43 = vld [vmem:[%s1 + $0xa0] sm:$0xff]
  %v44 = vld [vmem:[%s1 + $0xa8] sm:$0xff]
  %v45 = vld [vmem:[%s1 + $0xb0] sm:$0xff]
  %v46 = vld [vmem:[%s1 + $0xb8] sm:$0xff]
  %v47 = vld [vmem:[%s1 + $0xc0] sm:$0xff]
  %v48 = vld [vmem:[%s1 + $0xc8] sm:$0xff]
  %v49 = vld [vmem:[%s1 + $0xd0] sm:$0xff]
  %v50 = vld [vmem:[%s1 + $0xd8] sm:$0xff]
  %v51 = vld [vmem:[%s1 + $0xe0] sm:$0xff]
  %v52 = vld [vmem:[%s1 + $0xe8] sm:$0xff]
  %v53 = vld [vmem:[%s1 + $0xf0] sm:$0xff]
  %v54 = vld [vmem:[%s1 + $0xf8] sm:$0xff]
  %v55 = vld [vmem:[%s1 + $0x100] sm:$0xff]
  %v56 = vld [vmem:[%s1 + $0x108] sm:$0xff]
  %v57 = vld [vmem:[%s1 + $0x110] sm:$0xff]
  %v58 = vld [vmem:[%s1 + $0x118] sm:$0xff]
  %v59 = vld [vmem:[%s1 + $0x120] sm:$0xff]
  %v60 = vld [vmem:[%s1 + $0x128] sm:$0xff]
  %v61 = vlaneseq
  %v62 = vand.u32 %v61, 127
  %63 = vset.pattern.permute.xlu0 0
  %64 = vperm.xlu0 %63, %v23
  %v65 = vpop.permute.xlu0 %64
  %66 = vset.pattern.permute.xlu0 0
  %67 = vperm.xlu0 %66, %v24
  %v68 = vpop.permute.xlu0 %67
  %69 = vset.pattern.permute.xlu0 0
  %70 = vperm.xlu0 %69, %v25
  %v71 = vpop.permute.xlu0 %70
  %72 = vset.pattern.permute.xlu0 0
  %73 = vperm.xlu0 %72, %v26
  %v74 = vpop.permute.xlu0 %73
  %75 = vset.pattern.permute.xlu0 0
  %76 = vperm.xlu0 %75, %v27
  %v77 = vpop.permute.xlu0 %76
  %78 = vset.pattern.permute.xlu0 0
  %79 = vperm.xlu0 %78, %v28
  %v80 = vpop.permute.xlu0 %79
  %81 = vset.pattern.permute.xlu0 0
  %82 = vperm.xlu0 %81, %v29
  %v83 = vpop.permute.xlu0 %82
  %84 = vset.pattern.permute.xlu0 0
  %85 = vperm.xlu0 %84, %v30
  %v86 = vpop.permute.xlu0 %85
  %87 = vset.pattern.permute.xlu0 0
  %88 = vperm.xlu0 %87, %v31
  %v89 = vpop.permute.xlu0 %88
  %90 = vset.pattern.permute.xlu0 0
  %91 = vperm.xlu0 %90, %v32
  %v92 = vpop.permute.xlu0 %91
  %93 = vset.pattern.permute.xlu0 0
  %94 = vperm.xlu0 %93, %v33
  %v95 = vpop.permute.xlu0 %94
  %96 = vset.pattern.permute.xlu0 0
  %97 = vperm.xlu0 %96, %v34
  %v98 = vpop.permute.xlu0 %97
  %99 = vset.pattern.permute.xlu0 0
  %100 = vperm.xlu0 %99, %v35
  %v101 = vpop.permute.xlu0 %100
  %102 = vset.pattern.permute.xlu0 0
  %103 = vperm.xlu0 %102, %v36
  %v104 = vpop.permute.xlu0 %103
  %105 = vset.pattern.permute.xlu0 0
  %106 = vperm.xlu0 %105, %v37
  %v107 = vpop.permute.xlu0 %106
  %108 = vset.pattern.permute.xlu0 0
  %109 = vperm.xlu0 %108, %v38
  %v110 = vpop.permute.xlu0 %109
  %111 = vset.pattern.permute.xlu0 0
  %112 = vperm.xlu0 %111, %v39
  %v113 = vpop.permute.xlu0 %112
  %114 = vset.pattern.permute.xlu0 0
  %115 = vperm.xlu0 %114, %v40
  %v116 = vpop.permute.xlu0 %115
  %117 = vset.pattern.permute.xlu0 0
  %118 = vperm.xlu0 %117, %v41
  %v119 = vpop.permute.xlu0 %118
  %120 = vset.pattern.permute.xlu0 0
  %121 = vperm.xlu0 %120, %v42
  %v122 = vpop.permute.xlu0 %121
  %123 = vset.pattern.permute.xlu0 0
  %124 = vperm.xlu0 %123, %v43
  %v125 = vpop.permute.xlu0 %124
  %126 = vset.pattern.permute.xlu0 0
  %127 = vperm.xlu0 %126, %v44
  %v128 = vpop.permute.xlu0 %127
  %129 = vset.pattern.permute.xlu0 0
  %130 = vperm.xlu0 %129, %v45
  %v131 = vpop.permute.xlu0 %130
  %132 = vset.pattern.permute.xlu0 0
  %133 = vperm.xlu0 %132, %v46
  %v134 = vpop.permute.xlu0 %133
  %135 = vset.pattern.permute.xlu0 0
  %136 = vperm.xlu0 %135, %v47
  %v137 = vpop.permute.xlu0 %136
  %138 = vset.pattern.permute.xlu0 0
  %139 = vperm.xlu0 %138, %v48
  %v140 = vpop.permute.xlu0 %139
  %141 = vset.pattern.permute.xlu0 0
  %142 = vperm.xlu0 %141, %v49
  %v143 = vpop.permute.xlu0 %142
  %144 = vset.pattern.permute.xlu0 0
  %145 = vperm.xlu0 %144, %v50
  %v146 = vpop.permute.xlu0 %145
  %147 = vset.pattern.permute.xlu0 0
  %148 = vperm.xlu0 %147, %v51
  %v149 = vpop.permute.xlu0 %148
  %150 = vset.pattern.permute.xlu0 0
  %151 = vperm.xlu0 %150, %v52
  %v152 = vpop.permute.xlu0 %151
  %153 = vset.pattern.permute.xlu0 0
  %154 = vperm.xlu0 %153, %v53
  %v155 = vpop.permute.xlu0 %154
  %156 = vset.pattern.permute.xlu0 0
  %157 = vperm.xlu0 %156, %v54
  %v158 = vpop.permute.xlu0 %157
  %159 = vset.pattern.permute.xlu0 0
  %160 = vperm.xlu0 %159, %v55
  %v161 = vpop.permute.xlu0 %160
  %162 = vset.pattern.permute.xlu0 0
  %163 = vperm.xlu0 %162, %v56
  %v164 = vpop.permute.xlu0 %163
  %165 = vset.pattern.permute.xlu0 0
  %166 = vperm.xlu0 %165, %v57
  %v167 = vpop.permute.xlu0 %166
  %168 = vset.pattern.permute.xlu0 0
  %169 = vperm.xlu0 %168, %v58
  %v170 = vpop.permute.xlu0 %169
  %171 = vset.pattern.permute.xlu0 0
  %172 = vperm.xlu0 %171, %v59
  %v173 = vpop.permute.xlu0 %172
  %174 = vset.pattern.permute.xlu0 0
  %175 = vperm.xlu0 %174, %v60
  %v176 = vpop.permute.xlu0 %175
  %vm177 = vcmp.eq.s32.totalorder %v65, %v62
  %vm178 = vcmp.eq.s32.totalorder %v68, %v62
  %vm179 = vcmp.eq.s32.totalorder %v71, %v62
  %vm180 = vcmp.eq.s32.totalorder %v74, %v62
  %vm181 = vcmp.eq.s32.totalorder %v77, %v62
  %vm182 = vcmp.eq.s32.totalorder %v80, %v62
  %vm183 = vcmp.eq.s32.totalorder %v83, %v62
  %vm184 = vcmp.eq.s32.totalorder %v86, %v62
  %vm185 = vcmp.eq.s32.totalorder %v89, %v62
  %vm186 = vcmp.eq.s32.totalorder %v92, %v62
  %vm187 = vcmp.eq.s32.totalorder %v95, %v62
  %vm188 = vcmp.eq.s32.totalorder %v98, %v62
  %vm189 = vcmp.eq.s32.totalorder %v101, %v62
  %vm190 = vcmp.eq.s32.totalorder %v104, %v62
  %vm191 = vcmp.eq.s32.totalorder %v107, %v62
  %vm192 = vcmp.eq.s32.totalorder %v110, %v62
  %vm193 = vcmp.eq.s32.totalorder %v113, %v62
  %vm194 = vcmp.eq.s32.totalorder %v116, %v62
  %vm195 = vcmp.eq.s32.totalorder %v119, %v62
  %vm196 = vcmp.eq.s32.totalorder %v122, %v62
  %vm197 = vcmp.eq.s32.totalorder %v125, %v62
  %vm198 = vcmp.eq.s32.totalorder %v128, %v62
  %vm199 = vcmp.eq.s32.totalorder %v131, %v62
  %vm200 = vcmp.eq.s32.totalorder %v134, %v62
  %vm201 = vcmp.eq.s32.totalorder %v137, %v62
  %vm202 = vcmp.eq.s32.totalorder %v140, %v62
  %vm203 = vcmp.eq.s32.totalorder %v143, %v62
  %vm204 = vcmp.eq.s32.totalorder %v146, %v62
  %vm205 = vcmp.eq.s32.totalorder %v149, %v62
  %vm206 = vcmp.eq.s32.totalorder %v152, %v62
  %vm207 = vcmp.eq.s32.totalorder %v155, %v62
  %vm208 = vcmp.eq.s32.totalorder %v158, %v62
  %vm209 = vcmp.eq.s32.totalorder %v161, %v62
  %vm210 = vcmp.eq.s32.totalorder %v164, %v62
  %vm211 = vcmp.eq.s32.totalorder %v167, %v62
  %vm212 = vcmp.eq.s32.totalorder %v170, %v62
  %vm213 = vcmp.eq.s32.totalorder %v173, %v62
  %vm214 = vcmp.eq.s32.totalorder %v176, %v62
  %v215 = vsel %vm177, 1, 0
  %v216 = vsel %vm178, 1, 0
  %v217 = vsel %vm179, 1, 0
  %v218 = vsel %vm180, 1, 0
  %v219 = vsel %vm181, 1, 0
  %v220 = vsel %vm182, 1, 0
  %v221 = vsel %vm183, 1, 0
  %v222 = vsel %vm184, 1, 0
  %v223 = vsel %vm185, 1, 0
  %v224 = vsel %vm186, 1, 0
  %v225 = vsel %vm187, 1, 0
  %v226 = vsel %vm188, 1, 0
  %v227 = vsel %vm189, 1, 0
  %v228 = vsel %vm190, 1, 0
  %v229 = vsel %vm191, 1, 0
  %v230 = vsel %vm192, 1, 0
  %v231 = vsel %vm193, 1, 0
  %v232 = vsel %vm194, 1, 0
  %v233 = vsel %vm195, 1, 0
  %v234 = vsel %vm196, 1, 0
  %v235 = vsel %vm197, 1, 0
  %v236 = vsel %vm198, 1, 0
  %v237 = vsel %vm199, 1, 0
  %v238 = vsel %vm200, 1, 0
  %v239 = vsel %vm201, 1, 0
  %v240 = vsel %vm202, 1, 0
  %v241 = vsel %vm203, 1, 0
  %v242 = vsel %vm204, 1, 0
  %v243 = vsel %vm205, 1, 0
  %v244 = vsel %vm206, 1, 0
  %v245 = vsel %vm207, 1, 0
  %v246 = vsel %vm208, 1, 0
  %v247 = vsel %vm209, 1, 0
  %v248 = vsel %vm210, 1, 0
  %v249 = vsel %vm211, 1, 0
  %v250 = vsel %vm212, 1, 0
  %v251 = vsel %vm213, 1, 0
  %v252 = vsel %vm214, 1, 0
  %v253 = vcvt.s32.f32 %v215
  %v254 = vcvt.s32.f32 %v216
  %v255 = vcvt.s32.f32 %v217
  %v256 = vcvt.s32.f32 %v218
  %v257 = vcvt.s32.f32 %v219
  %v258 = vcvt.s32.f32 %v220
  %v259 = vcvt.s32.f32 %v221
  %v260 = vcvt.s32.f32 %v222
  %v261 = vcvt.s32.f32 %v223
  %v262 = vcvt.s32.f32 %v224
  %v263 = vcvt.s32.f32 %v225
  %v264 = vcvt.s32.f32 %v226
  %v265 = vcvt.s32.f32 %v227
  %v266 = vcvt.s32.f32 %v228
  %v267 = vcvt.s32.f32 %v229
  %v268 = vcvt.s32.f32 %v230
  %v269 = vcvt.s32.f32 %v231
  %v270 = vcvt.s32.f32 %v232
  %v271 = vcvt.s32.f32 %v233
  %v272 = vcvt.s32.f32 %v234
  %v273 = vcvt.s32.f32 %v235
  %v274 = vcvt.s32.f32 %v236
  %v275 = vcvt.s32.f32 %v237
  %v276 = vcvt.s32.f32 %v238
  %v277 = vcvt.s32.f32 %v239
  %v278 = vcvt.s32.f32 %v240
  %v279 = vcvt.s32.f32 %v241
  %v280 = vcvt.s32.f32 %v242
  %v281 = vcvt.s32.f32 %v243
  %v282 = vcvt.s32.f32 %v244
  %v283 = vcvt.s32.f32 %v245
  %v284 = vcvt.s32.f32 %v246
  %v285 = vcvt.s32.f32 %v247
  %v286 = vcvt.s32.f32 %v248
  %v287 = vcvt.s32.f32 %v249
  %v288 = vcvt.s32.f32 %v250
  %v289 = vcvt.s32.f32 %v251
  %v290 = vcvt.s32.f32 %v252
  %v291 = vld [vmem:[%s0] sm:$0xff]
  %v292 = vld [vmem:[%s0 + $0x8] sm:$0xff]
  %v293 = vld [vmem:[%s0 + $0x10] sm:$0xff]
  %v294 = vld [vmem:[%s0 + $0x18] sm:$0xff]
  %v295 = vld [vmem:[%s0 + $0x20] sm:$0xff]
  %v296 = vld [vmem:[%s0 + $0x28] sm:$0xff]
  %v297 = vld [vmem:[%s0 + $0x30] sm:$0xff]
  %v298 = vld [vmem:[%s0 + $0x38] sm:$0xff]
  %v299 = vld [vmem:[%s0 + $0x40] sm:$0xff]
  %v300 = vld [vmem:[%s0 + $0x48] sm:$0xff]
  %v301 = vld [vmem:[%s0 + $0x50] sm:$0xff]
  %v302 = vld [vmem:[%s0 + $0x58] sm:$0xff]
  %v303 = vld [vmem:[%s0 + $0x60] sm:$0xff]
  %v304 = vld [vmem:[%s0 + $0x68] sm:$0xff]
  %v305 = vld [vmem:[%s0 + $0x70] sm:$0xff]
  %v306 = vld [vmem:[%s0 + $0x78] sm:$0xff]
  %v307 = vld [vmem:[%s0 + $0x80] sm:$0xff]
  %v308 = vld [vmem:[%s0 + $0x88] sm:$0xff]
  %v309 = vld [vmem:[%s0 + $0x90] sm:$0xff]
  %v310 = vld [vmem:[%s0 + $0x98] sm:$0xff]
  %v311 = vld [vmem:[%s0 + $0xa0] sm:$0xff]
  %v312 = vld [vmem:[%s0 + $0xa8] sm:$0xff]
  %v313 = vld [vmem:[%s0 + $0xb0] sm:$0xff]
  %v314 = vld [vmem:[%s0 + $0xb8] sm:$0xff]
  %v315 = vld [vmem:[%s0 + $0xc0] sm:$0xff]
  %v316 = vld [vmem:[%s0 + $0xc8] sm:$0xff]
  %v317 = vld [vmem:[%s0 + $0xd0] sm:$0xff]
  %v318 = vld [vmem:[%s0 + $0xd8] sm:$0xff]
  %v319 = vld [vmem:[%s0 + $0xe0] sm:$0xff]
  %v320 = vld [vmem:[%s0 + $0xe8] sm:$0xff]
  %v321 = vld [vmem:[%s0 + $0xf0] sm:$0xff]
  %v322 = vld [vmem:[%s0 + $0xf8] sm:$0xff]
  %v323 = vld [vmem:[%s0 + $0x100] sm:$0xff]
  %v324 = vld [vmem:[%s0 + $0x108] sm:$0xff]
  %v325 = vld [vmem:[%s0 + $0x110] sm:$0xff]
  %v326 = vld [vmem:[%s0 + $0x118] sm:$0xff]
  %v327 = vld [vmem:[%s0 + $0x120] sm:$0xff]
  %v328 = vld [vmem:[%s0 + $0x128] sm:$0xff]
  %v329 = vld [vmem:[%s2] sm:$0xff]
  %v330 = vld [vmem:[%s2 + $0x8] sm:$0xff]
  %v331 = vld [vmem:[%s2 + $0x10] sm:$0xff]
  %v332 = vld [vmem:[%s2 + $0x18] sm:$0xff]
  %v333 = vld [vmem:[%s3] sm:$0xff]
  %vm334 = vcmask 64512
  %v336 = vsel %vm334, %v253, 0
  %v339 = vsel %vm334, %v254, 0
  %v342 = vsel %vm334, %v255, 0
  %v345 = vsel %vm334, %v256, 0
  %v348 = vsel %vm334, %v257, 0
  %v351 = vsel %vm334, %v258, 0
  %v354 = vsel %vm334, %v259, 0
  %v357 = vsel %vm334, %v260, 0
  %v360 = vsel %vm334, %v261, 0
  %v363 = vsel %vm334, %v262, 0
  %v366 = vsel %vm334, %v263, 0
  %v369 = vsel %vm334, %v264, 0
  %v372 = vsel %vm334, %v265, 0
  %v375 = vsel %vm334, %v266, 0
  %v378 = vsel %vm334, %v267, 0
  %v381 = vsel %vm334, %v268, 0
  %v384 = vsel %vm334, %v269, 0
  %v387 = vsel %vm334, %v270, 0
  %v390 = vsel %vm334, %v271, 0
  %v393 = vsel %vm334, %v272, 0
  %v396 = vsel %vm334, %v273, 0
  %v399 = vsel %vm334, %v274, 0
  %v402 = vsel %vm334, %v275, 0
  %v405 = vsel %vm334, %v276, 0
  %v408 = vsel %vm334, %v277, 0
  %v411 = vsel %vm334, %v278, 0
  %v414 = vsel %vm334, %v279, 0
  %v417 = vsel %vm334, %v280, 0
  %v420 = vsel %vm334, %v281, 0
  %v423 = vsel %vm334, %v282, 0
  %v426 = vsel %vm334, %v283, 0
  %v429 = vsel %vm334, %v284, 0
  %v432 = vsel %vm334, %v285, 0
  %v435 = vsel %vm334, %v286, 0
  %v438 = vsel %vm334, %v287, 0
  %v441 = vsel %vm334, %v288, 0
  %v444 = vsel %vm334, %v289, 0
  %v447 = vsel %vm334, %v290, 0
  %449 = vmatprep.subr.mxu0 0.0
  %450 = vmatpush1.msra.mxu0 %v333
  %451 = vmatprep.subr.mxu0 0.0
  %452 = vmatpush1.msra.mxu0 0.0
  %453 = vmatprep.subr.mxu0 0.0
  %454 = vmatpush1.msra.mxu0 0.0
  %455 = vmatprep.subr.mxu0 0.0
  %456 = vmatpush1.msra.mxu0 0.0
  %457 = vmatprep.subr.mxu0 0.0
  %458 = vmatpush1.msra.mxu0 0.0
  %459 = vmatprep.subr.mxu0 0.0
  %460 = vmatpush1.msra.mxu0 0.0
  %461 = vmatprep.subr.mxu0 0.0
  %462 = vmatpush1.msra.mxu0 0.0
  %463 = vmatprep.subr.mxu0 0.0
  %464 = vmatpush1.msra.mxu0 0.0
  %465 = vmatprep.subr.mxu0 0.0
  %466 = vmatpush1.msra.mxu0 0.0
  %467 = vmatprep.subr.mxu0 0.0
  %468 = vmatpush1.msra.mxu0 0.0
  %469 = vmatprep.subr.mxu0 0.0
  %470 = vmatpush1.msra.mxu0 0.0
  %471 = vmatprep.subr.mxu0 0.0
  %472 = vmatpush1.msra.mxu0 0.0
  %473 = vmatprep.subr.mxu0 0.0
  %474 = vmatpush1.msra.mxu0 0.0
  %475 = vmatprep.subr.mxu0 0.0
  %476 = vmatpush1.msra.mxu0 0.0
  %477 = vmatprep.subr.mxu0 0.0
  %478 = vmatpush1.msra.mxu0 0.0
  %479 = vmatprep.subr.mxu0 0.0
  %480 = vmatpush1.msra.mxu0 0.0
  %481 = vmatprep.subr.mxu0 0.0
  %482 = vmatpush1.msra.mxu0 0.0
  %483 = vmatprep.subr.mxu0 0.0
  %484 = vmatpush1.msra.mxu0 0.0
  %485 = vmatprep.subr.mxu0 0.0
  %486 = vmatpush1.msra.mxu0 0.0
  %487 = vmatprep.subr.mxu0 0.0
  %488 = vmatpush1.msra.mxu0 0.0
  %489 = vmatprep.subr.mxu0 0.0
  %490 = vmatpush1.msra.mxu0 0.0
  %491 = vmatprep.subr.mxu0 0.0
  %492 = vmatpush1.msra.mxu0 0.0
  %493 = vmatprep.subr.mxu0 0.0
  %494 = vmatpush1.msra.mxu0 0.0
  %495 = vmatprep.subr.mxu0 0.0
  %496 = vmatpush1.msra.mxu0 0.0
  %497 = vmatprep.subr.mxu0 0.0
  %498 = vmatpush1.msra.mxu0 0.0
  %499 = vmatprep.subr.mxu0 0.0
  %500 = vmatpush1.msra.mxu0 0.0
  %501 = vmatprep.subr.mxu0 0.0
  %502 = vmatpush1.msra.mxu0 0.0
  %503 = vmatprep.subr.mxu0 0.0
  %504 = vmatpush1.msra.mxu0 0.0
  %505 = vmatprep.subr.mxu0 0.0
  %506 = vmatpush1.msra.mxu0 0.0
  %507 = vmatprep.subr.mxu0 0.0
  %508 = vmatpush1.msra.mxu0 0.0
  %509 = vmatprep.subr.mxu0 0.0
  %510 = vmatpush1.msra.mxu0 0.0
  %511 = vmatprep.subr.mxu0 0.0
  %512 = vmatpush1.msra.mxu0 0.0
  %513 = vmatprep.mubr.f32.mxu0 0.0
  %514 = vmatmul.mubr.f32.gmra.mrb[0].mxu0 %v336
  %v515 = vpop.f32.mrb[0].mxu0
  %v516 = vadd.f32 0.0, %v515
  %v517 = vpop.f32.mrb[0].mxu0
  %518 = vmatprep.mubr.f32.mxu0 0.0
  %519 = vmatmul.mubr.f32.gmra.mrb[0].mxu0 %v339
  %v520 = vpop.f32.mrb[0].mxu0
  %v521 = vadd.f32 0.0, %v520
  %v522 = vpop.f32.mrb[0].mxu0
  %523 = vmatprep.mubr.f32.mxu0 0.0
  %524 = vmatmul.mubr.f32.gmra.mrb[0].mxu0 %v342
  %v525 = vpop.f32.mrb[0].mxu0
  %v526 = vadd.f32 0.0, %v525
  %v527 = vpop.f32.mrb[0].mxu0
  %528 = vmatprep.mubr.f32.mxu0 0.0
  %529 = vmatmul.mubr.f32.gmra.mrb[0].mxu0 %v345
  %v530 = vpop.f32.mrb[0].mxu0
  %v531 = vadd.f32 0.0, %v530
  %v532 = vpop.f32.mrb[0].mxu0
  %533 = vmatprep.mubr.f32.mxu0 0.0
  %534 = vmatmul.mubr.f32.gmra.mrb[0].mxu0 %v348
  %v535 = vpop.f32.mrb[0].mxu0
  %v536 = vadd.f32 0.0, %v535
  %v537 = vpop.f32.mrb[0].mxu0
  %538 = vmatprep.mubr.f32.mxu0 0.0
  %539 = vmatmul.mubr.f32.gmra.mrb[0].mxu0 %v351
  %v540 = vpop.f32.mrb[0].mxu0
  %v541 = vadd.f32 0.0, %v540
  %v542 = vpop.f32.mrb[0].mxu0
  %543 = vmatprep.mubr.f32.mxu0 0.0
  %544 = vmatmul.mubr.f32.gmra.mrb[0].mxu0 %v354
  %v545 = vpop.f32.mrb[0].mxu0
  %v546 = vadd.f32 0.0, %v545
  %v547 = vpop.f32.mrb[0].mxu0
  %548 = vmatprep.mubr.f32.mxu0 0.0
  %549 = vmatmul.mubr.f32.gmra.mrb[0].mxu0 %v357
  %v550 = vpop.f32.mrb[0].mxu0
  %v551 = vadd.f32 0.0, %v550
  %v552 = vpop.f32.mrb[0].mxu0
  %553 = vmatprep.mubr.f32.mxu0 0.0
  %554 = vmatmul.mubr.f32.gmra.mrb[0].mxu0 %v360
  %v555 = vpop.f32.mrb[0].mxu0
  %v556 = vadd.f32 0.0, %v555
  %v557 = vpop.f32.mrb[0].mxu0
  %558 = vmatprep.mubr.f32.mxu0 0.0
  %559 = vmatmul.mubr.f32.gmra.mrb[0].mxu0 %v363
  %v560 = vpop.f32.mrb[0].mxu0
  %v561 = vadd.f32 0.0, %v560
  %v562 = vpop.f32.mrb[0].mxu0
  %563 = vmatprep.mubr.f32.mxu0 0.0
  %564 = vmatmul.mubr.f32.gmra.mrb[0].mxu0 %v366
  %v565 = vpop.f32.mrb[0].mxu0
  %v566 = vadd.f32 0.0, %v565
  %v567 = vpop.f32.mrb[0].mxu0
  %568 = vmatprep.mubr.f32.mxu0 0.0
  %569 = vmatmul.mubr.f32.gmra.mrb[0].mxu0 %v369
  %v570 = vpop.f32.mrb[0].mxu0
  %v571 = vadd.f32 0.0, %v570
  %v572 = vpop.f32.mrb[0].mxu0
  %573 = vmatprep.mubr.f32.mxu0 0.0
  %574 = vmatmul.mubr.f32.gmra.mrb[0].mxu0 %v372
  %v575 = vpop.f32.mrb[0].mxu0
  %v576 = vadd.f32 0.0, %v575
  %v577 = vpop.f32.mrb[0].mxu0
  %578 = vmatprep.mubr.f32.mxu0 0.0
  %579 = vmatmul.mubr.f32.gmra.mrb[0].mxu0 %v375
  %v580 = vpop.f32.mrb[0].mxu0
  %v581 = vadd.f32 0.0, %v580
  %v582 = vpop.f32.mrb[0].mxu0
  %583 = vmatprep.mubr.f32.mxu0 0.0
  %584 = vmatmul.mubr.f32.gmra.mrb[0].mxu0 %v378
  %v585 = vpop.f32.mrb[0].mxu0
  %v586 = vadd.f32 0.0, %v585
  %v587 = vpop.f32.mrb[0].mxu0
  %588 = vmatprep.mubr.f32.mxu0 0.0
  %589 = vmatmul.mubr.f32.gmra.mrb[0].mxu0 %v381
  %v590 = vpop.f32.mrb[0].mxu0
  %v591 = vadd.f32 0.0, %v590
  %v592 = vpop.f32.mrb[0].mxu0
  %593 = vmatprep.mubr.f32.mxu0 0.0
  %594 = vmatmul.mubr.f32.gmra.mrb[0].mxu0 %v384
  %v595 = vpop.f32.mrb[0].mxu0
  %v596 = vadd.f32 0.0, %v595
  %v597 = vpop.f32.mrb[0].mxu0
  %598 = vmatprep.mubr.f32.mxu0 0.0
  %599 = vmatmul.mubr.f32.gmra.mrb[0].mxu0 %v387
  %v600 = vpop.f32.mrb[0].mxu0
  %v601 = vadd.f32 0.0, %v600
  %v602 = vpop.f32.mrb[0].mxu0
  %603 = vmatprep.mubr.f32.mxu0 0.0
  %604 = vmatmul.mubr.f32.gmra.mrb[0].mxu0 %v390
  %v605 = vpop.f32.mrb[0].mxu0
  %v606 = vadd.f32 0.0, %v605
  %v607 = vpop.f32.mrb[0].mxu0
  %608 = vmatprep.mubr.f32.mxu0 0.0
  %609 = vmatmul.mubr.f32.gmra.mrb[0].mxu0 %v393
  %v610 = vpop.f32.mrb[0].mxu0
  %v611 = vadd.f32 0.0, %v610
  %v612 = vpop.f32.mrb[0].mxu0
  %613 = vmatprep.mubr.f32.mxu0 0.0
  %614 = vmatmul.mubr.f32.gmra.mrb[0].mxu0 %v396
  %v615 = vpop.f32.mrb[0].mxu0
  %v616 = vadd.f32 0.0, %v615
  %v617 = vpop.f32.mrb[0].mxu0
  %618 = vmatprep.mubr.f32.mxu0 0.0
  %619 = vmatmul.mubr.f32.gmra.mrb[0].mxu0 %v399
  %v620 = vpop.f32.mrb[0].mxu0
  %v621 = vadd.f32 0.0, %v620
  %v622 = vpop.f32.mrb[0].mxu0
  %623 = vmatprep.mubr.f32.mxu0 0.0
  %624 = vmatmul.mubr.f32.gmra.mrb[0].mxu0 %v402
  %v625 = vpop.f32.mrb[0].mxu0
  %v626 = vadd.f32 0.0, %v625
  %v627 = vpop.f32.mrb[0].mxu0
  %628 = vmatprep.mubr.f32.mxu0 0.0
  %629 = vmatmul.mubr.f32.gmra.mrb[0].mxu0 %v405
  %v630 = vpop.f32.mrb[0].mxu0
  %v631 = vadd.f32 0.0, %v630
  %v632 = vpop.f32.mrb[0].mxu0
  %633 = vmatprep.mubr.f32.mxu0 0.0
  %634 = vmatmul.mubr.f32.gmra.mrb[0].mxu0 %v408
  %v635 = vpop.f32.mrb[0].mxu0
  %v636 = vadd.f32 0.0, %v635
  %v637 = vpop.f32.mrb[0].mxu0
  %638 = vmatprep.mubr.f32.mxu0 0.0
  %639 = vmatmul.mubr.f32.gmra.mrb[0].mxu0 %v411
  %v640 = vpop.f32.mrb[0].mxu0
  %v641 = vadd.f32 0.0, %v640
  %v642 = vpop.f32.mrb[0].mxu0
  %643 = vmatprep.mubr.f32.mxu0 0.0
  %644 = vmatmul.mubr.f32.gmra.mrb[0].mxu0 %v414
  %v645 = vpop.f32.mrb[0].mxu0
  %v646 = vadd.f32 0.0, %v645
  %v647 = vpop.f32.mrb[0].mxu0
  %648 = vmatprep.mubr.f32.mxu0 0.0
  %649 = vmatmul.mubr.f32.gmra.mrb[0].mxu0 %v417
  %v650 = vpop.f32.mrb[0].mxu0
  %v651 = vadd.f32 0.0, %v650
  %v652 = vpop.f32.mrb[0].mxu0
  %653 = vmatprep.mubr.f32.mxu0 0.0
  %654 = vmatmul.mubr.f32.gmra.mrb[0].mxu0 %v420
  %v655 = vpop.f32.mrb[0].mxu0
  %v656 = vadd.f32 0.0, %v655
  %v657 = vpop.f32.mrb[0].mxu0
  %658 = vmatprep.mubr.f32.mxu0 0.0
  %659 = vmatmul.mubr.f32.gmra.mrb[0].mxu0 %v423
  %v660 = vpop.f32.mrb[0].mxu0
  %v661 = vadd.f32 0.0, %v660
  %v662 = vpop.f32.mrb[0].mxu0
  %663 = vmatprep.mubr.f32.mxu0 0.0
  %664 = vmatmul.mubr.f32.gmra.mrb[0].mxu0 %v426
  %v665 = vpop.f32.mrb[0].mxu0
  %v666 = vadd.f32 0.0, %v665
  %v667 = vpop.f32.mrb[0].mxu0
  %668 = vmatprep.mubr.f32.mxu0 0.0
  %669 = vmatmul.mubr.f32.gmra.mrb[0].mxu0 %v429
  %v670 = vpop.f32.mrb[0].mxu0
  %v671 = vadd.f32 0.0, %v670
  %v672 = vpop.f32.mrb[0].mxu0
  %673 = vmatprep.mubr.f32.mxu0 0.0
  %674 = vmatmul.mubr.f32.gmra.mrb[0].mxu0 %v432
  %v675 = vpop.f32.mrb[0].mxu0
  %v676 = vadd.f32 0.0, %v675
  %v677 = vpop.f32.mrb[0].mxu0
  %678 = vmatprep.mubr.f32.mxu0 0.0
  %679 = vmatmul.mubr.f32.gmra.mrb[0].mxu0 %v435
  %v680 = vpop.f32.mrb[0].mxu0
  %v681 = vadd.f32 0.0, %v680
  %v682 = vpop.f32.mrb[0].mxu0
  %683 = vmatprep.mubr.f32.mxu0 0.0
  %684 = vmatmul.mubr.f32.gmra.mrb[0].mxu0 %v438
  %v685 = vpop.f32.mrb[0].mxu0
  %v686 = vadd.f32 0.0, %v685
  %v687 = vpop.f32.mrb[0].mxu0
  %688 = vmatprep.mubr.f32.mxu0 0.0
  %689 = vmatmul.mubr.f32.gmra.mrb[0].mxu0 %v441
  %v690 = vpop.f32.mrb[0].mxu0
  %v691 = vadd.f32 0.0, %v690
  %v692 = vpop.f32.mrb[0].mxu0
  %693 = vmatprep.mubr.f32.mxu0 0.0
  %694 = vmatmul.mubr.f32.gmra.mrb[0].mxu0 %v444
  %v695 = vpop.f32.mrb[0].mxu0
  %v696 = vadd.f32 0.0, %v695
  %v697 = vpop.f32.mrb[0].mxu0
  %698 = vmatprep.mubr.f32.mxu0 0.0
  %699 = vmatmul.mubr.f32.gmra.mrb[0].mxu0 %v447
  %v700 = vpop.f32.mrb[0].mxu0
  %v701 = vadd.f32 0.0, %v700
  %v702 = vpop.f32.mrb[0].mxu0
  %703 = vdwg.mxu0
  %vm704 = vcmask 261120
  %v706 = vsel %vm704, %v291, 0
  %v709 = vsel %vm704, %v292, 0
  %v712 = vsel %vm704, %v293, 0
  %v715 = vsel %vm704, %v294, 0
  %v718 = vsel %vm704, %v295, 0
  %v721 = vsel %vm704, %v296, 0
  %v724 = vsel %vm704, %v297, 0
  %v727 = vsel %vm704, %v298, 0
  %v730 = vsel %vm704, %v299, 0
  %v733 = vsel %vm704, %v300, 0
  %v736 = vsel %vm704, %v301, 0
  %v739 = vsel %vm704, %v302, 0
  %v742 = vsel %vm704, %v303, 0
  %v745 = vsel %vm704, %v304, 0
  %v748 = vsel %vm704, %v305, 0
  %v751 = vsel %vm704, %v306, 0
  %v754 = vsel %vm704, %v307, 0
  %v757 = vsel %vm704, %v308, 0
  %v760 = vsel %vm704, %v309, 0
  %v763 = vsel %vm704, %v310, 0
  %v766 = vsel %vm704, %v311, 0
  %v769 = vsel %vm704, %v312, 0
  %v772 = vsel %vm704, %v313, 0
  %v775 = vsel %vm704, %v314, 0
  %v778 = vsel %vm704, %v315, 0
  %v781 = vsel %vm704, %v316, 0
  %v784 = vsel %vm704, %v317, 0
  %v787 = vsel %vm704, %v318, 0
  %v790 = vsel %vm704, %v319, 0
  %v793 = vsel %vm704, %v320, 0
  %v796 = vsel %vm704, %v321, 0
  %v799 = vsel %vm704, %v322, 0
  %v802 = vsel %vm704, %v323, 0
  %v805 = vsel %vm704, %v324, 0
  %v808 = vsel %vm704, %v325, 0
  %v811 = vsel %vm704, %v326, 0
  %v814 = vsel %vm704, %v327, 0
  %v817 = vsel %vm704, %v328, 0
  %819 = vmatprep.subr.mxu0 0.0
  %820 = vmatpush1.msra.mxu0 %v329
  %821 = vmatprep.subr.mxu0 0.0
  %822 = vmatpush1.msra.mxu0 %v330
  %823 = vmatprep.subr.mxu0 0.0
  %824 = vmatpush1.msra.mxu0 %v331
  %825 = vmatprep.subr.mxu0 0.0
  %826 = vmatpush1.msra.mxu0 %v332
  %827 = vmatprep.subr.mxu0 0.0
  %828 = vmatpush1.msra.mxu0 0.0
  %829 = vmatprep.subr.mxu0 0.0
  %830 = vmatpush1.msra.mxu0 0.0
  %831 = vmatprep.subr.mxu0 0.0
  %832 = vmatpush1.msra.mxu0 0.0
  %833 = vmatprep.subr.mxu0 0.0
  %834 = vmatpush1.msra.mxu0 0.0
  %835 = vmatprep.subr.mxu0 0.0
  %836 = vmatpush1.msra.mxu0 0.0
  %837 = vmatprep.subr.mxu0 0.0
  %838 = vmatpush1.msra.mxu0 0.0
  %839 = vmatprep.subr.mxu0 0.0
  %840 = vmatpush1.msra.mxu0 0.0
  %841 = vmatprep.subr.mxu0 0.0
  %842 = vmatpush1.msra.mxu0 0.0
  %843 = vmatprep.subr.mxu0 0.0
  %844 = vmatpush1.msra.mxu0 0.0
  %845 = vmatprep.subr.mxu0 0.0
  %846 = vmatpush1.msra.mxu0 0.0
  %847 = vmatprep.subr.mxu0 0.0
  %848 = vmatpush1.msra.mxu0 0.0
  %849 = vmatprep.subr.mxu0 0.0
  %850 = vmatpush1.msra.mxu0 0.0
  %851 = vmatprep.subr.mxu0 0.0
  %852 = vmatpush1.msra.mxu0 0.0
  %853 = vmatprep.subr.mxu0 0.0
  %854 = vmatpush1.msra.mxu0 0.0
  %855 = vmatprep.subr.mxu0 0.0
  %856 = vmatpush1.msra.mxu0 0.0
  %857 = vmatprep.subr.mxu0 0.0
  %858 = vmatpush1.msra.mxu0 0.0
  %859 = vmatprep.subr.mxu0 0.0
  %860 = vmatpush1.msra.mxu0 0.0
  %861 = vmatprep.subr.mxu0 0.0
  %862 = vmatpush1.msra.mxu0 0.0
  %863 = vmatprep.subr.mxu0 0.0
  %864 = vmatpush1.msra.mxu0 0.0
  %865 = vmatprep.subr.mxu0 0.0
  %866 = vmatpush1.msra.mxu0 0.0
  %867 = vmatprep.subr.mxu0 0.0
  %868 = vmatpush1.msra.mxu0 0.0
  %869 = vmatprep.subr.mxu0 0.0
  %870 = vmatpush1.msra.mxu0 0.0
  %871 = vmatprep.subr.mxu0 0.0
  %872 = vmatpush1.msra.mxu0 0.0
  %873 = vmatprep.subr.mxu0 0.0
  %874 = vmatpush1.msra.mxu0 0.0
  %875 = vmatprep.subr.mxu0 0.0
  %876 = vmatpush1.msra.mxu0 0.0
  %877 = vmatprep.subr.mxu0 0.0
  %878 = vmatpush1.msra.mxu0 0.0
  %879 = vmatprep.subr.mxu0 0.0
  %880 = vmatpush1.msra.mxu0 0.0
  %881 = vmatprep.subr.mxu0 0.0
  %882 = vmatpush1.msra.mxu0 0.0
  %883 = vmatprep.mubr.f32.mxu0 0.0
  %884 = vmatmul.mubr.f32.gmra.mrb[0].mxu0 %v706
  %v885 = vpop.f32.mrb[0].mxu0
  %v886 = vadd.f32 %v516, %v885
  %v887 = vpop.f32.mrb[0].mxu0
  %888 = vmatprep.mubr.f32.mxu0 0.0
  %889 = vmatmul.mubr.f32.gmra.mrb[0].mxu0 %v709
  %v890 = vpop.f32.mrb[0].mxu0
  %v891 = vadd.f32 %v521, %v890
  %v892 = vpop.f32.mrb[0].mxu0
  %893 = vmatprep.mubr.f32.mxu0 0.0
  %894 = vmatmul.mubr.f32.gmra.mrb[0].mxu0 %v712
  %v895 = vpop.f32.mrb[0].mxu0
  %v896 = vadd.f32 %v526, %v895
  %v897 = vpop.f32.mrb[0].mxu0
  %898 = vmatprep.mubr.f32.mxu0 0.0
  %899 = vmatmul.mubr.f32.gmra.mrb[0].mxu0 %v715
  %v900 = vpop.f32.mrb[0].mxu0
  %v901 = vadd.f32 %v531, %v900
  %v902 = vpop.f32.mrb[0].mxu0
  %903 = vmatprep.mubr.f32.mxu0 0.0
  %904 = vmatmul.mubr.f32.gmra.mrb[0].mxu0 %v718
  %v905 = vpop.f32.mrb[0].mxu0
  %v906 = vadd.f32 %v536, %v905
  %v907 = vpop.f32.mrb[0].mxu0
  %908 = vmatprep.mubr.f32.mxu0 0.0
  %909 = vmatmul.mubr.f32.gmra.mrb[0].mxu0 %v721
  %v910 = vpop.f32.mrb[0].mxu0
  %v911 = vadd.f32 %v541, %v910
  %v912 = vpop.f32.mrb[0].mxu0
  %913 = vmatprep.mubr.f32.mxu0 0.0
  %914 = vmatmul.mubr.f32.gmra.mrb[0].mxu0 %v724
  %v915 = vpop.f32.mrb[0].mxu0
  %v916 = vadd.f32 %v546, %v915
  %v917 = vpop.f32.mrb[0].mxu0
  %918 = vmatprep.mubr.f32.mxu0 0.0
  %919 = vmatmul.mubr.f32.gmra.mrb[0].mxu0 %v727
  %v920 = vpop.f32.mrb[0].mxu0
  %v921 = vadd.f32 %v551, %v920
  %v922 = vpop.f32.mrb[0].mxu0
  %923 = vmatprep.mubr.f32.mxu0 0.0
  %924 = vmatmul.mubr.f32.gmra.mrb[0].mxu0 %v730
  %v925 = vpop.f32.mrb[0].mxu0
  %v926 = vadd.f32 %v556, %v925
  %v927 = vpop.f32.mrb[0].mxu0
  %928 = vmatprep.mubr.f32.mxu0 0.0
  %929 = vmatmul.mubr.f32.gmra.mrb[0].mxu0 %v733
  %v930 = vpop.f32.mrb[0].mxu0
  %v931 = vadd.f32 %v561, %v930
  %v932 = vpop.f32.mrb[0].mxu0
  %933 = vmatprep.mubr.f32.mxu0 0.0
  %934 = vmatmul.mubr.f32.gmra.mrb[0].mxu0 %v736
  %v935 = vpop.f32.mrb[0].mxu0
  %v936 = vadd.f32 %v566, %v935
  %v937 = vpop.f32.mrb[0].mxu0
  %938 = vmatprep.mubr.f32.mxu0 0.0
  %939 = vmatmul.mubr.f32.gmra.mrb[0].mxu0 %v739
  %v940 = vpop.f32.mrb[0].mxu0
  %v941 = vadd.f32 %v571, %v940
  %v942 = vpop.f32.mrb[0].mxu0
  %943 = vmatprep.mubr.f32.mxu0 0.0
  %944 = vmatmul.mubr.f32.gmra.mrb[0].mxu0 %v742
  %v945 = vpop.f32.mrb[0].mxu0
  %v946 = vadd.f32 %v576, %v945
  %v947 = vpop.f32.mrb[0].mxu0
  %948 = vmatprep.mubr.f32.mxu0 0.0
  %949 = vmatmul.mubr.f32.gmra.mrb[0].mxu0 %v745
  %v950 = vpop.f32.mrb[0].mxu0
  %v951 = vadd.f32 %v581, %v950
  %v952 = vpop.f32.mrb[0].mxu0
  %953 = vmatprep.mubr.f32.mxu0 0.0
  %954 = vmatmul.mubr.f32.gmra.mrb[0].mxu0 %v748
  %v955 = vpop.f32.mrb[0].mxu0
  %v956 = vadd.f32 %v586, %v955
  %v957 = vpop.f32.mrb[0].mxu0
  %958 = vmatprep.mubr.f32.mxu0 0.0
  %959 = vmatmul.mubr.f32.gmra.mrb[0].mxu0 %v751
  %v960 = vpop.f32.mrb[0].mxu0
  %v961 = vadd.f32 %v591, %v960
  %v962 = vpop.f32.mrb[0].mxu0
  %963 = vmatprep.mubr.f32.mxu0 0.0
  %964 = vmatmul.mubr.f32.gmra.mrb[0].mxu0 %v754
  %v965 = vpop.f32.mrb[0].mxu0
  %v966 = vadd.f32 %v596, %v965
  %v967 = vpop.f32.mrb[0].mxu0
  %968 = vmatprep.mubr.f32.mxu0 0.0
  %969 = vmatmul.mubr.f32.gmra.mrb[0].mxu0 %v757
  %v970 = vpop.f32.mrb[0].mxu0
  %v971 = vadd.f32 %v601, %v970
  %v972 = vpop.f32.mrb[0].mxu0
  %973 = vmatprep.mubr.f32.mxu0 0.0
  %974 = vmatmul.mubr.f32.gmra.mrb[0].mxu0 %v760
  %v975 = vpop.f32.mrb[0].mxu0
  %v976 = vadd.f32 %v606, %v975
  %v977 = vpop.f32.mrb[0].mxu0
  %978 = vmatprep.mubr.f32.mxu0 0.0
  %979 = vmatmul.mubr.f32.gmra.mrb[0].mxu0 %v763
  %v980 = vpop.f32.mrb[0].mxu0
  %v981 = vadd.f32 %v611, %v980
  %v982 = vpop.f32.mrb[0].mxu0
  %983 = vmatprep.mubr.f32.mxu0 0.0
  %984 = vmatmul.mubr.f32.gmra.mrb[0].mxu0 %v766
  %v985 = vpop.f32.mrb[0].mxu0
  %v986 = vadd.f32 %v616, %v985
  %v987 = vpop.f32.mrb[0].mxu0
  %988 = vmatprep.mubr.f32.mxu0 0.0
  %989 = vmatmul.mubr.f32.gmra.mrb[0].mxu0 %v769
  %v990 = vpop.f32.mrb[0].mxu0
  %v991 = vadd.f32 %v621, %v990
  %v992 = vpop.f32.mrb[0].mxu0
  %993 = vmatprep.mubr.f32.mxu0 0.0
  %994 = vmatmul.mubr.f32.gmra.mrb[0].mxu0 %v772
  %v995 = vpop.f32.mrb[0].mxu0
  %v996 = vadd.f32 %v626, %v995
  %v997 = vpop.f32.mrb[0].mxu0
  %998 = vmatprep.mubr.f32.mxu0 0.0
  %999 = vmatmul.mubr.f32.gmra.mrb[0].mxu0 %v775
  %v1000 = vpop.f32.mrb[0].mxu0
  %v1001 = vadd.f32 %v631, %v1000
  %v1002 = vpop.f32.mrb[0].mxu0
  %1003 = vmatprep.mubr.f32.mxu0 0.0
  %1004 = vmatmul.mubr.f32.gmra.mrb[0].mxu0 %v778
  %v1005 = vpop.f32.mrb[0].mxu0
  %v1006 = vadd.f32 %v636, %v1005
  %v1007 = vpop.f32.mrb[0].mxu0
  %1008 = vmatprep.mubr.f32.mxu0 0.0
  %1009 = vmatmul.mubr.f32.gmra.mrb[0].mxu0 %v781
  %v1010 = vpop.f32.mrb[0].mxu0
  %v1011 = vadd.f32 %v641, %v1010
  %v1012 = vpop.f32.mrb[0].mxu0
  %1013 = vmatprep.mubr.f32.mxu0 0.0
  %1014 = vmatmul.mubr.f32.gmra.mrb[0].mxu0 %v784
  %v1015 = vpop.f32.mrb[0].mxu0
  %v1016 = vadd.f32 %v646, %v1015
  %v1017 = vpop.f32.mrb[0].mxu0
  %1018 = vmatprep.mubr.f32.mxu0 0.0
  %1019 = vmatmul.mubr.f32.gmra.mrb[0].mxu0 %v787
  %v1020 = vpop.f32.mrb[0].mxu0
  %v1021 = vadd.f32 %v651, %v1020
  %v1022 = vpop.f32.mrb[0].mxu0
  %1023 = vmatprep.mubr.f32.mxu0 0.0
  %1024 = vmatmul.mubr.f32.gmra.mrb[0].mxu0 %v790
  %v1025 = vpop.f32.mrb[0].mxu0
  %v1026 = vadd.f32 %v656, %v1025
  %v1027 = vpop.f32.mrb[0].mxu0
  %1028 = vmatprep.mubr.f32.mxu0 0.0
  %1029 = vmatmul.mubr.f32.gmra.mrb[0].mxu0 %v793
  %v1030 = vpop.f32.mrb[0].mxu0
  %v1031 = vadd.f32 %v661, %v1030
  %v1032 = vpop.f32.mrb[0].mxu0
  %1033 = vmatprep.mubr.f32.mxu0 0.0
  %1034 = vmatmul.mubr.f32.gmra.mrb[0].mxu0 %v796
  %v1035 = vpop.f32.mrb[0].mxu0
  %v1036 = vadd.f32 %v666, %v1035
  %v1037 = vpop.f32.mrb[0].mxu0
  %1038 = vmatprep.mubr.f32.mxu0 0.0
  %1039 = vmatmul.mubr.f32.gmra.mrb[0].mxu0 %v799
  %v1040 = vpop.f32.mrb[0].mxu0
  %v1041 = vadd.f32 %v671, %v1040
  %v1042 = vpop.f32.mrb[0].mxu0
  %1043 = vmatprep.mubr.f32.mxu0 0.0
  %1044 = vmatmul.mubr.f32.gmra.mrb[0].mxu0 %v802
  %v1045 = vpop.f32.mrb[0].mxu0
  %v1046 = vadd.f32 %v676, %v1045
  %v1047 = vpop.f32.mrb[0].mxu0
  %1048 = vmatprep.mubr.f32.mxu0 0.0
  %1049 = vmatmul.mubr.f32.gmra.mrb[0].mxu0 %v805
  %v1050 = vpop.f32.mrb[0].mxu0
  %v1051 = vadd.f32 %v681, %v1050
  %v1052 = vpop.f32.mrb[0].mxu0
  %1053 = vmatprep.mubr.f32.mxu0 0.0
  %1054 = vmatmul.mubr.f32.gmra.mrb[0].mxu0 %v808
  %v1055 = vpop.f32.mrb[0].mxu0
  %v1056 = vadd.f32 %v686, %v1055
  %v1057 = vpop.f32.mrb[0].mxu0
  %1058 = vmatprep.mubr.f32.mxu0 0.0
  %1059 = vmatmul.mubr.f32.gmra.mrb[0].mxu0 %v811
  %v1060 = vpop.f32.mrb[0].mxu0
  %v1061 = vadd.f32 %v691, %v1060
  %v1062 = vpop.f32.mrb[0].mxu0
  %1063 = vmatprep.mubr.f32.mxu0 0.0
  %1064 = vmatmul.mubr.f32.gmra.mrb[0].mxu0 %v814
  %v1065 = vpop.f32.mrb[0].mxu0
  %v1066 = vadd.f32 %v696, %v1065
  %v1067 = vpop.f32.mrb[0].mxu0
  %1068 = vmatprep.mubr.f32.mxu0 0.0
  %1069 = vmatmul.mubr.f32.gmra.mrb[0].mxu0 %v817
  %v1070 = vpop.f32.mrb[0].mxu0
  %v1071 = vadd.f32 %v701, %v1070
  %v1072 = vpop.f32.mrb[0].mxu0
  %1073 = vdwg.mxu0
  %v1074 = vmax.f32 %v886, 0.0
  %v1075 = vmax.f32 %v891, 0.0
  %v1076 = vmax.f32 %v896, 0.0
  %v1077 = vmax.f32 %v901, 0.0
  %v1078 = vmax.f32 %v906, 0.0
  %v1079 = vmax.f32 %v911, 0.0
  %v1080 = vmax.f32 %v916, 0.0
  %v1081 = vmax.f32 %v921, 0.0
  %v1082 = vmax.f32 %v926, 0.0
  %v1083 = vmax.f32 %v931, 0.0
  %v1084 = vmax.f32 %v936, 0.0
  %v1085 = vmax.f32 %v941, 0.0
  %v1086 = vmax.f32 %v946, 0.0
  %v1087 = vmax.f32 %v951, 0.0
  %v1088 = vmax.f32 %v956, 0.0
  %v1089 = vmax.f32 %v961, 0.0
  %v1090 = vmax.f32 %v966, 0.0
  %v1091 = vmax.f32 %v971, 0.0
  %v1092 = vmax.f32 %v976, 0.0
  %v1093 = vmax.f32 %v981, 0.0
  %v1094 = vmax.f32 %v986, 0.0
  %v1095 = vmax.f32 %v991, 0.0
  %v1096 = vmax.f32 %v996, 0.0
  %v1097 = vmax.f32 %v1001, 0.0
  %v1098 = vmax.f32 %v1006, 0.0
  %v1099 = vmax.f32 %v1011, 0.0
  %v1100 = vmax.f32 %v1016, 0.0
  %v1101 = vmax.f32 %v1021, 0.0
  %v1102 = vmax.f32 %v1026, 0.0
  %v1103 = vmax.f32 %v1031, 0.0
  %v1104 = vmax.f32 %v1036, 0.0
  %v1105 = vmax.f32 %v1041, 0.0
  %v1106 = vmax.f32 %v1046, 0.0
  %v1107 = vmax.f32 %v1051, 0.0
  %v1108 = vmax.f32 %v1056, 0.0
  %v1109 = vmax.f32 %v1061, 0.0
  %v1110 = vmax.f32 %v1066, 0.0
  %v1111 = vmax.f32 %v1071, 0.0
  %v1112 = vld [vmem:[%s4] sm:$0xff]
  %v1113 = vld [vmem:[%s4 + $0x8] sm:$0xff]
  %v1114 = vld [vmem:[%s4 + $0x10] sm:$0xff]
  %v1115 = vld [vmem:[%s4 + $0x18] sm:$0xff]
  %v1116 = vld [vmem:[%s4 + $0x20] sm:$0xff]
  %v1117 = vld [vmem:[%s4 + $0x28] sm:$0xff]
  %v1118 = vld [vmem:[%s4 + $0x30] sm:$0xff]
  %v1119 = vld [vmem:[%s4 + $0x38] sm:$0xff]
  %v1120 = vld [vmem:[%s4 + $0x40] sm:$0xff]
  %v1121 = vld [vmem:[%s4 + $0x48] sm:$0xff]
  %v1122 = vld [vmem:[%s4 + $0x50] sm:$0xff]
  %v1123 = vld [vmem:[%s4 + $0x58] sm:$0xff]
  %v1124 = vld [vmem:[%s4 + $0x60] sm:$0xff]
  %v1125 = vld [vmem:[%s4 + $0x68] sm:$0xff]
  %v1126 = vld [vmem:[%s4 + $0x70] sm:$0xff]
  %v1127 = vld [vmem:[%s4 + $0x78] sm:$0xff]
  %v1128 = vld [vmem:[%s5] sm:$0x1]
  %v1130 = vlaneseq
  %v1131 = vshrl.u32 %v1130, 7
  %v1132 = vsub.s32 0, %v1131
  %v1133 = vrot.slane %v1128, %v1132
  %1135 = vmatprep.subr.mxu0 0.0
  %1136 = vmatpush1.msra.mxu0 %v1112
  %1137 = vmatprep.subr.mxu0 0.0
  %1138 = vmatpush1.msra.mxu0 %v1113
  %1139 = vmatprep.subr.mxu0 0.0
  %1140 = vmatpush1.msra.mxu0 %v1114
  %1141 = vmatprep.subr.mxu0 0.0
  %1142 = vmatpush1.msra.mxu0 %v1115
  %1143 = vmatprep.subr.mxu0 0.0
  %1144 = vmatpush1.msra.mxu0 %v1116
  %1145 = vmatprep.subr.mxu0 0.0
  %1146 = vmatpush1.msra.mxu0 %v1117
  %1147 = vmatprep.subr.mxu0 0.0
  %1148 = vmatpush1.msra.mxu0 %v1118
  %1149 = vmatprep.subr.mxu0 0.0
  %1150 = vmatpush1.msra.mxu0 %v1119
  %1151 = vmatprep.subr.mxu0 0.0
  %1152 = vmatpush1.msra.mxu0 %v1120
  %1153 = vmatprep.subr.mxu0 0.0
  %1154 = vmatpush1.msra.mxu0 %v1121
  %1155 = vmatprep.subr.mxu0 0.0
  %1156 = vmatpush1.msra.mxu0 %v1122
  %1157 = vmatprep.subr.mxu0 0.0
  %1158 = vmatpush1.msra.mxu0 %v1123
  %1159 = vmatprep.subr.mxu0 0.0
  %1160 = vmatpush1.msra.mxu0 %v1124
  %1161 = vmatprep.subr.mxu0 0.0
  %1162 = vmatpush1.msra.mxu0 %v1125
  %1163 = vmatprep.subr.mxu0 0.0
  %1164 = vmatpush1.msra.mxu0 %v1126
  %1165 = vmatprep.subr.mxu0 0.0
  %1166 = vmatpush1.msra.mxu0 %v1127
  %1167 = vmatprep.subr.mxu0 0.0
  %1168 = vmatpush1.msra.mxu0 0.0
  %1169 = vmatprep.subr.mxu0 0.0
  %1170 = vmatpush1.msra.mxu0 0.0
  %1171 = vmatprep.subr.mxu0 0.0
  %1172 = vmatpush1.msra.mxu0 0.0
  %1173 = vmatprep.subr.mxu0 0.0
  %1174 = vmatpush1.msra.mxu0 0.0
  %1175 = vmatprep.subr.mxu0 0.0
  %1176 = vmatpush1.msra.mxu0 0.0
  %1177 = vmatprep.subr.mxu0 0.0
  %1178 = vmatpush1.msra.mxu0 0.0
  %1179 = vmatprep.subr.mxu0 0.0
  %1180 = vmatpush1.msra.mxu0 0.0
  %1181 = vmatprep.subr.mxu0 0.0
  %1182 = vmatpush1.msra.mxu0 0.0
  %1183 = vmatprep.subr.mxu0 0.0
  %1184 = vmatpush1.msra.mxu0 0.0
  %1185 = vmatprep.subr.mxu0 0.0
  %1186 = vmatpush1.msra.mxu0 0.0
  %1187 = vmatprep.subr.mxu0 0.0
  %1188 = vmatpush1.msra.mxu0 0.0
  %1189 = vmatprep.subr.mxu0 0.0
  %1190 = vmatpush1.msra.mxu0 0.0
  %1191 = vmatprep.subr.mxu0 0.0
  %1192 = vmatpush1.msra.mxu0 0.0
  %1193 = vmatprep.subr.mxu0 0.0
  %1194 = vmatpush1.msra.mxu0 0.0
  %1195 = vmatprep.subr.mxu0 0.0
  %1196 = vmatpush1.msra.mxu0 0.0
  %1197 = vmatprep.subr.mxu0 0.0
  %1198 = vmatpush1.msra.mxu0 0.0
  %1199 = vmatprep.mubr.f32.mxu0 0.0
  %1200 = vmatmul.mubr.f32.gmra.mrb[0].mxu0 %v1074
  %v1201 = vpop.f32.mrb[0].mxu0
  %v1202 = vadd.f32 %v1133, %v1201
  %v1203 = vpop.f32.mrb[0].mxu0
  %1204 = vmatprep.mubr.f32.mxu0 0.0
  %1205 = vmatmul.mubr.f32.gmra.mrb[0].mxu0 %v1075
  %v1206 = vpop.f32.mrb[0].mxu0
  %v1207 = vadd.f32 %v1133, %v1206
  %v1208 = vpop.f32.mrb[0].mxu0
  %1209 = vmatprep.mubr.f32.mxu0 0.0
  %1210 = vmatmul.mubr.f32.gmra.mrb[0].mxu0 %v1076
  %v1211 = vpop.f32.mrb[0].mxu0
  %v1212 = vadd.f32 %v1133, %v1211
  %v1213 = vpop.f32.mrb[0].mxu0
  %1214 = vmatprep.mubr.f32.mxu0 0.0
  %1215 = vmatmul.mubr.f32.gmra.mrb[0].mxu0 %v1077
  %v1216 = vpop.f32.mrb[0].mxu0
  %v1217 = vadd.f32 %v1133, %v1216
  %v1218 = vpop.f32.mrb[0].mxu0
  %1219 = vmatprep.mubr.f32.mxu0 0.0
  %1220 = vmatmul.mubr.f32.gmra.mrb[0].mxu0 %v1078
  %v1221 = vpop.f32.mrb[0].mxu0
  %v1222 = vadd.f32 %v1133, %v1221
  %v1223 = vpop.f32.mrb[0].mxu0
  %1224 = vmatprep.mubr.f32.mxu0 0.0
  %1225 = vmatmul.mubr.f32.gmra.mrb[0].mxu0 %v1079
  %v1226 = vpop.f32.mrb[0].mxu0
  %v1227 = vadd.f32 %v1133, %v1226
  %v1228 = vpop.f32.mrb[0].mxu0
  %1229 = vmatprep.mubr.f32.mxu0 0.0
  %1230 = vmatmul.mubr.f32.gmra.mrb[0].mxu0 %v1080
  %v1231 = vpop.f32.mrb[0].mxu0
  %v1232 = vadd.f32 %v1133, %v1231
  %v1233 = vpop.f32.mrb[0].mxu0
  %1234 = vmatprep.mubr.f32.mxu0 0.0
  %1235 = vmatmul.mubr.f32.gmra.mrb[0].mxu0 %v1081
  %v1236 = vpop.f32.mrb[0].mxu0
  %v1237 = vadd.f32 %v1133, %v1236
  %v1238 = vpop.f32.mrb[0].mxu0
  %1239 = vmatprep.mubr.f32.mxu0 0.0
  %1240 = vmatmul.mubr.f32.gmra.mrb[0].mxu0 %v1082
  %v1241 = vpop.f32.mrb[0].mxu0
  %v1242 = vadd.f32 %v1133, %v1241
  %v1243 = vpop.f32.mrb[0].mxu0
  %1244 = vmatprep.mubr.f32.mxu0 0.0
  %1245 = vmatmul.mubr.f32.gmra.mrb[0].mxu0 %v1083
  %v1246 = vpop.f32.mrb[0].mxu0
  %v1247 = vadd.f32 %v1133, %v1246
  %v1248 = vpop.f32.mrb[0].mxu0
  %1249 = vmatprep.mubr.f32.mxu0 0.0
  %1250 = vmatmul.mubr.f32.gmra.mrb[0].mxu0 %v1084
  %v1251 = vpop.f32.mrb[0].mxu0
  %v1252 = vadd.f32 %v1133, %v1251
  %v1253 = vpop.f32.mrb[0].mxu0
  %1254 = vmatprep.mubr.f32.mxu0 0.0
  %1255 = vmatmul.mubr.f32.gmra.mrb[0].mxu0 %v1085
  %v1256 = vpop.f32.mrb[0].mxu0
  %v1257 = vadd.f32 %v1133, %v1256
  %v1258 = vpop.f32.mrb[0].mxu0
  %1259 = vmatprep.mubr.f32.mxu0 0.0
  %1260 = vmatmul.mubr.f32.gmra.mrb[0].mxu0 %v1086
  %v1261 = vpop.f32.mrb[0].mxu0
  %v1262 = vadd.f32 %v1133, %v1261
  %v1263 = vpop.f32.mrb[0].mxu0
  %1264 = vmatprep.mubr.f32.mxu0 0.0
  %1265 = vmatmul.mubr.f32.gmra.mrb[0].mxu0 %v1087
  %v1266 = vpop.f32.mrb[0].mxu0
  %v1267 = vadd.f32 %v1133, %v1266
  %v1268 = vpop.f32.mrb[0].mxu0
  %1269 = vmatprep.mubr.f32.mxu0 0.0
  %1270 = vmatmul.mubr.f32.gmra.mrb[0].mxu0 %v1088
  %v1271 = vpop.f32.mrb[0].mxu0
  %v1272 = vadd.f32 %v1133, %v1271
  %v1273 = vpop.f32.mrb[0].mxu0
  %1274 = vmatprep.mubr.f32.mxu0 0.0
  %1275 = vmatmul.mubr.f32.gmra.mrb[0].mxu0 %v1089
  %v1276 = vpop.f32.mrb[0].mxu0
  %v1277 = vadd.f32 %v1133, %v1276
  %v1278 = vpop.f32.mrb[0].mxu0
  %1279 = vmatprep.mubr.f32.mxu0 0.0
  %1280 = vmatmul.mubr.f32.gmra.mrb[0].mxu0 %v1090
  %v1281 = vpop.f32.mrb[0].mxu0
  %v1282 = vadd.f32 %v1133, %v1281
  %v1283 = vpop.f32.mrb[0].mxu0
  %1284 = vmatprep.mubr.f32.mxu0 0.0
  %1285 = vmatmul.mubr.f32.gmra.mrb[0].mxu0 %v1091
  %v1286 = vpop.f32.mrb[0].mxu0
  %v1287 = vadd.f32 %v1133, %v1286
  %v1288 = vpop.f32.mrb[0].mxu0
  %1289 = vmatprep.mubr.f32.mxu0 0.0
  %1290 = vmatmul.mubr.f32.gmra.mrb[0].mxu0 %v1092
  %v1291 = vpop.f32.mrb[0].mxu0
  %v1292 = vadd.f32 %v1133, %v1291
  %v1293 = vpop.f32.mrb[0].mxu0
  %1294 = vmatprep.mubr.f32.mxu0 0.0
  %1295 = vmatmul.mubr.f32.gmra.mrb[0].mxu0 %v1093
  %v1296 = vpop.f32.mrb[0].mxu0
  %v1297 = vadd.f32 %v1133, %v1296
  %v1298 = vpop.f32.mrb[0].mxu0
  %1299 = vmatprep.mubr.f32.mxu0 0.0
  %1300 = vmatmul.mubr.f32.gmra.mrb[0].mxu0 %v1094
  %v1301 = vpop.f32.mrb[0].mxu0
  %v1302 = vadd.f32 %v1133, %v1301
  %v1303 = vpop.f32.mrb[0].mxu0
  %1304 = vmatprep.mubr.f32.mxu0 0.0
  %1305 = vmatmul.mubr.f32.gmra.mrb[0].mxu0 %v1095
  %v1306 = vpop.f32.mrb[0].mxu0
  %v1307 = vadd.f32 %v1133, %v1306
  %v1308 = vpop.f32.mrb[0].mxu0
  %1309 = vmatprep.mubr.f32.mxu0 0.0
  %1310 = vmatmul.mubr.f32.gmra.mrb[0].mxu0 %v1096
  %v1311 = vpop.f32.mrb[0].mxu0
  %v1312 = vadd.f32 %v1133, %v1311
  %v1313 = vpop.f32.mrb[0].mxu0
  %1314 = vmatprep.mubr.f32.mxu0 0.0
  %1315 = vmatmul.mubr.f32.gmra.mrb[0].mxu0 %v1097
  %v1316 = vpop.f32.mrb[0].mxu0
  %v1317 = vadd.f32 %v1133, %v1316
  %v1318 = vpop.f32.mrb[0].mxu0
  %1319 = vmatprep.mubr.f32.mxu0 0.0
  %1320 = vmatmul.mubr.f32.gmra.mrb[0].mxu0 %v1098
  %v1321 = vpop.f32.mrb[0].mxu0
  %v1322 = vadd.f32 %v1133, %v1321
  %v1323 = vpop.f32.mrb[0].mxu0
  %1324 = vmatprep.mubr.f32.mxu0 0.0
  %1325 = vmatmul.mubr.f32.gmra.mrb[0].mxu0 %v1099
  %v1326 = vpop.f32.mrb[0].mxu0
  %v1327 = vadd.f32 %v1133, %v1326
  %v1328 = vpop.f32.mrb[0].mxu0
  %1329 = vmatprep.mubr.f32.mxu0 0.0
  %1330 = vmatmul.mubr.f32.gmra.mrb[0].mxu0 %v1100
  %v1331 = vpop.f32.mrb[0].mxu0
  %v1332 = vadd.f32 %v1133, %v1331
  %v1333 = vpop.f32.mrb[0].mxu0
  %1334 = vmatprep.mubr.f32.mxu0 0.0
  %1335 = vmatmul.mubr.f32.gmra.mrb[0].mxu0 %v1101
  %v1336 = vpop.f32.mrb[0].mxu0
  %v1337 = vadd.f32 %v1133, %v1336
  %v1338 = vpop.f32.mrb[0].mxu0
  %1339 = vmatprep.mubr.f32.mxu0 0.0
  %1340 = vmatmul.mubr.f32.gmra.mrb[0].mxu0 %v1102
  %v1341 = vpop.f32.mrb[0].mxu0
  %v1342 = vadd.f32 %v1133, %v1341
  %v1343 = vpop.f32.mrb[0].mxu0
  %1344 = vmatprep.mubr.f32.mxu0 0.0
  %1345 = vmatmul.mubr.f32.gmra.mrb[0].mxu0 %v1103
  %v1346 = vpop.f32.mrb[0].mxu0
  %v1347 = vadd.f32 %v1133, %v1346
  %v1348 = vpop.f32.mrb[0].mxu0
  %1349 = vmatprep.mubr.f32.mxu0 0.0
  %1350 = vmatmul.mubr.f32.gmra.mrb[0].mxu0 %v1104
  %v1351 = vpop.f32.mrb[0].mxu0
  %v1352 = vadd.f32 %v1133, %v1351
  %v1353 = vpop.f32.mrb[0].mxu0
  %1354 = vmatprep.mubr.f32.mxu0 0.0
  %1355 = vmatmul.mubr.f32.gmra.mrb[0].mxu0 %v1105
  %v1356 = vpop.f32.mrb[0].mxu0
  %v1357 = vadd.f32 %v1133, %v1356
  %v1358 = vpop.f32.mrb[0].mxu0
  %1359 = vmatprep.mubr.f32.mxu0 0.0
  %1360 = vmatmul.mubr.f32.gmra.mrb[0].mxu0 %v1106
  %v1361 = vpop.f32.mrb[0].mxu0
  %v1362 = vadd.f32 %v1133, %v1361
  %v1363 = vpop.f32.mrb[0].mxu0
  %1364 = vmatprep.mubr.f32.mxu0 0.0
  %1365 = vmatmul.mubr.f32.gmra.mrb[0].mxu0 %v1107
  %v1366 = vpop.f32.mrb[0].mxu0
  %v1367 = vadd.f32 %v1133, %v1366
  %v1368 = vpop.f32.mrb[0].mxu0
  %1369 = vmatprep.mubr.f32.mxu0 0.0
  %1370 = vmatmul.mubr.f32.gmra.mrb[0].mxu0 %v1108
  %v1371 = vpop.f32.mrb[0].mxu0
  %v1372 = vadd.f32 %v1133, %v1371
  %v1373 = vpop.f32.mrb[0].mxu0
  %1374 = vmatprep.mubr.f32.mxu0 0.0
  %1375 = vmatmul.mubr.f32.gmra.mrb[0].mxu0 %v1109
  %v1376 = vpop.f32.mrb[0].mxu0
  %v1377 = vadd.f32 %v1133, %v1376
  %v1378 = vpop.f32.mrb[0].mxu0
  %1379 = vmatprep.mubr.f32.mxu0 0.0
  %1380 = vmatmul.mubr.f32.gmra.mrb[0].mxu0 %v1110
  %v1381 = vpop.f32.mrb[0].mxu0
  %v1382 = vadd.f32 %v1133, %v1381
  %v1383 = vpop.f32.mrb[0].mxu0
  %1384 = vmatprep.mubr.f32.mxu0 0.0
  %1385 = vmatmul.mubr.f32.gmra.mrb[0].mxu0 %v1111
  %v1386 = vpop.f32.mrb[0].mxu0
  %v1387 = vadd.f32 %v1133, %v1386
  %v1388 = vpop.f32.mrb[0].mxu0
  %1389 = vdwg.mxu0
  %1390 = vst.msk [vmem:[%s6] sm:$0xff] %vm704, %v1202
  %1391 = vst.msk [vmem:[%s6 + $0x8] sm:$0xff] %vm704, %v1207
  %1392 = vst.msk [vmem:[%s6 + $0x10] sm:$0xff] %vm704, %v1212
  %1393 = vst.msk [vmem:[%s6 + $0x18] sm:$0xff] %vm704, %v1217
  %1394 = vst.msk [vmem:[%s6 + $0x20] sm:$0xff] %vm704, %v1222
  %1395 = vst.msk [vmem:[%s6 + $0x28] sm:$0xff] %vm704, %v1227
  %1396 = vst.msk [vmem:[%s6 + $0x30] sm:$0xff] %vm704, %v1232
  %1397 = vst.msk [vmem:[%s6 + $0x38] sm:$0xff] %vm704, %v1237
  %1398 = vst.msk [vmem:[%s6 + $0x40] sm:$0xff] %vm704, %v1242
  %1399 = vst.msk [vmem:[%s6 + $0x48] sm:$0xff] %vm704, %v1247
  %1400 = vst.msk [vmem:[%s6 + $0x50] sm:$0xff] %vm704, %v1252
  %1401 = vst.msk [vmem:[%s6 + $0x58] sm:$0xff] %vm704, %v1257
  %1402 = vst.msk [vmem:[%s6 + $0x60] sm:$0xff] %vm704, %v1262
  %1403 = vst.msk [vmem:[%s6 + $0x68] sm:$0xff] %vm704, %v1267
  %1404 = vst.msk [vmem:[%s6 + $0x70] sm:$0xff] %vm704, %v1272
  %1405 = vst.msk [vmem:[%s6 + $0x78] sm:$0xff] %vm704, %v1277
  %1406 = vst.msk [vmem:[%s6 + $0x80] sm:$0xff] %vm704, %v1282
  %1407 = vst.msk [vmem:[%s6 + $0x88] sm:$0xff] %vm704, %v1287
  %1408 = vst.msk [vmem:[%s6 + $0x90] sm:$0xff] %vm704, %v1292
  %1409 = vst.msk [vmem:[%s6 + $0x98] sm:$0xff] %vm704, %v1297
  %1410 = vst.msk [vmem:[%s6 + $0xa0] sm:$0xff] %vm704, %v1302
  %1411 = vst.msk [vmem:[%s6 + $0xa8] sm:$0xff] %vm704, %v1307
  %1412 = vst.msk [vmem:[%s6 + $0xb0] sm:$0xff] %vm704, %v1312
  %1413 = vst.msk [vmem:[%s6 + $0xb8] sm:$0xff] %vm704, %v1317
  %1414 = vst.msk [vmem:[%s6 + $0xc0] sm:$0xff] %vm704, %v1322
  %1415 = vst.msk [vmem:[%s6 + $0xc8] sm:$0xff] %vm704, %v1327
  %1416 = vst.msk [vmem:[%s6 + $0xd0] sm:$0xff] %vm704, %v1332
  %1417 = vst.msk [vmem:[%s6 + $0xd8] sm:$0xff] %vm704, %v1337
  %1418 = vst.msk [vmem:[%s6 + $0xe0] sm:$0xff] %vm704, %v1342
  %1419 = vst.msk [vmem:[%s6 + $0xe8] sm:$0xff] %vm704, %v1347
  %1420 = vst.msk [vmem:[%s6 + $0xf0] sm:$0xff] %vm704, %v1352
  %1421 = vst.msk [vmem:[%s6 + $0xf8] sm:$0xff] %vm704, %v1357
  %1422 = vst.msk [vmem:[%s6 + $0x100] sm:$0xff] %vm704, %v1362
  %1423 = vst.msk [vmem:[%s6 + $0x108] sm:$0xff] %vm704, %v1367
  %1424 = vst.msk [vmem:[%s6 + $0x110] sm:$0xff] %vm704, %v1372
  %1425 = vst.msk [vmem:[%s6 + $0x118] sm:$0xff] %vm704, %v1377
  %1426 = vst.msk [vmem:[%s6 + $0x120] sm:$0xff] %vm704, %v1382
  %1427 = vst.msk [vmem:[%s6 + $0x128] sm:$0xff] %vm704, %v1387
  // Predicated region
  $region26: #{tpu_custom_call.1} parent=0 // pred_check
    _
  $region27: #{tpu_custom_call.1} parent=0 // pred_check_branch
    %1429 = sbr.rel (0) target = $region29
  $region28: #{tpu_custom_call.1} parent=0 // pred_region
    _
  $region29: #{tpu_custom_call.1} parent=0 // pred_fallthru
    _
  // Predicated region
  $region30: #{tpu_custom_call.1} parent=0 // pred_check
    _
  $region31: #{tpu_custom_call.1} parent=0 // pred_check_branch
    %1431 = sbr.rel (0) target = $region33
  $region32: #{tpu_custom_call.1} parent=0 // pred_region
    _
  $region33: #{tpu_custom_call.1} parent=0 // pred_fallthru
    _

</llo_original>
